<compile_context>
chip_gen: v5e
topology: v5e:2x2
jax: 0.10.0
libtpu: 0.0.40
codegen_flags: <defaults>
</compile_context>

<pallas_src>
import jax
import jax.numpy as jnp
from jax.experimental import pallas as pl
from jax.experimental.pallas import tpu as pltpu


def _downsample_conv_kernel(t_ref, w_ref, b_ref, o_ref):
    """Lane-dense direct 3x3 / stride-2 conv, single block.

    t_ref : VMEM (C*9, L)  tap planes; row r = c*9 + (kh*3+kw), lane
            ((n*C_out+co)*OH+oh)*OW+ow holds x_pad[n, c, 2*oh+kh, 2*ow+kw]
            (value tiled across the co lane segments).
    w_ref : VMEM (C*9, L)  matching per-lane weights w[co, c, kh, kw]
            (broadcast across n, oh, ow).
    b_ref : VMEM (1, L)    per-lane bias b[co].
    o_ref : VMEM (1, L)    flat NCHW output slab (row-major (N,C_out,OH,OW)).
    """
    prod = t_ref[...] * w_ref[...]                      # (C*9, L) full-lane VPU
    acc = jnp.sum(prod, axis=0, keepdims=True)          # (1, L) sublane reduce
    o_ref[...] = (acc + b_ref[...]).astype(o_ref.dtype)


def downsample_conv2d(x, weight, bias):
    """Equivalent of nn.Conv2d(C, C_out, 3, stride=2, padding=1) on NCHW input.

    x: (N, C, H, W); weight: (C_out, C, 3, 3) [PyTorch OIHW]; bias: (C_out,).
    H and W must be even (the usual UNet downsample case).
    """
    N, C, H, W = x.shape
    C_out = weight.shape[0]
    assert weight.shape == (C_out, C, 3, 3)
    assert H % 2 == 0 and W % 2 == 0, "stride-2 downsample expects even H, W"
    OH, OW = H // 2, W // 2
    L = N * C_out * OH * OW                       # flat lane extent (>= 128 here)
    itemsize = jnp.dtype(x.dtype).itemsize

    # ---- wrapper-side layout prep (KBs of data; fine at these sizes) --------
    # Pad by 1, then extract the 9 stride-2 tap planes:
    #   taps[k, n, c, oh, ow] = x_pad[n, c, 2*oh + kh, 2*ow + kw], k = kh*3+kw
    xp = jnp.pad(x, ((0, 0), (0, 0), (1, 1), (1, 1)))            # (N, C, H+2, W+2)
    taps = jnp.stack(
        [xp[:, :, kh:kh + H:2, kw:kw + W:2]
         for kh in range(3) for kw in range(3)], axis=0)          # (9, N, C, OH, OW)

    # Tap table tiled over the C_out lane segments -> (C*9, L).
    t = jnp.transpose(taps, (2, 0, 1, 3, 4))                      # (C, 9, N, OH, OW)
    t = jnp.broadcast_to(t[:, :, :, None, :, :],
                         (C, 9, N, C_out, OH, OW))
    taps_b = t.reshape(C * 9, L)

    # Per-lane weight table (broadcast over n, oh, ow) -> (C*9, L).
    w9 = weight.astype(x.dtype).reshape(C_out, C, 9)              # w9[co, c, k]
    wt = jnp.transpose(w9, (1, 2, 0))                             # (C, 9, C_out)
    wt = jnp.broadcast_to(wt[:, :, None, :, None],
                          (C, 9, N, C_out, OH * OW))
    w_b = wt.reshape(C * 9, L)

    # Per-lane bias -> (1, L).
    bias_b = jnp.broadcast_to(bias.astype(x.dtype)[None, :, None],
                              (N, C_out, OH * OW)).reshape(1, L)

    flops = 2 * N * C_out * C * 9 * OH * OW
    bytes_accessed = (2 * (C * 9) * L + 2 * L) * itemsize

    out_flat = pl.pallas_call(
        _downsample_conv_kernel,
        out_shape=jax.ShapeDtypeStruct((1, L), x.dtype),
        in_specs=[
            pl.BlockSpec(memory_space=pltpu.MemorySpace.VMEM),    # tap table
            pl.BlockSpec(memory_space=pltpu.MemorySpace.VMEM),    # weight table
            pl.BlockSpec(memory_space=pltpu.MemorySpace.VMEM),    # bias
        ],
        out_specs=pl.BlockSpec(memory_space=pltpu.MemorySpace.VMEM),
        cost_estimate=pl.CostEstimate(
            flops=flops, transcendentals=0, bytes_accessed=bytes_accessed),
    )(taps_b, w_b, bias_b)

    # Lane index ((n*C_out+co)*OH+oh)*OW+ow is the row-major flat index of
    # (N, C_out, OH, OW), so this reshape is a free contiguous view.
    return out_flat.reshape(N, C_out, OH, OW)


if __name__ == "__main__":
    # Downsample(channels=4, use_conv=True, dims=2) on a (2, 4, 16, 16) input.
    N, C, H, W = 2, 4, 16, 16
    C_out = C

    key = jax.random.PRNGKey(0)
    kx, kw, kb = jax.random.split(key, 3)

    x = jax.random.normal(kx, (N, C, H, W), dtype=jnp.float32)

    # Deterministic init mimicking PyTorch Conv2d default (uniform, 1/sqrt(fan_in)).
    fan_in = C * 3 * 3
    bound = 1.0 / (fan_in ** 0.5)
    weight = jax.random.uniform(kw, (C_out, C, 3, 3), jnp.float32, -bound, bound)
    bias = jax.random.uniform(kb, (C_out,), jnp.float32, -bound, bound)

    y = downsample_conv2d(x, weight, bias)
    y = jax.block_until_ready(y)

    # Cross-check against XLA's conv (same semantics as nn.Conv2d stride=2 pad=1).
    ref = jax.lax.conv_general_dilated(
        x, weight, window_strides=(2, 2), padding=((1, 1), (1, 1)),
        dimension_numbers=("NCHW", "OIHW", "NCHW"),
    ) + bias[None, :, None, None]

    assert y.shape == (N, C_out, H // 2, W // 2), y.shape
    assert jnp.allclose(y, ref, atol=1e-5, rtol=1e-5), "mismatch vs reference conv"

    print("KERNEL_OK")
</pallas_src>

<mosaic_0001>
module attributes {stable_mosaic.version = 11 : i64} {
  func.func @_downsample_conv_kernel(%arg0: memref<36x512xf32, #tpu.memory_space<vmem>>, %arg1: memref<36x512xf32, #tpu.memory_space<vmem>>, %arg2: memref<1x512xf32, #tpu.memory_space<vmem>>, %arg3: memref<1x512xf32, #tpu.memory_space<vmem>>) attributes {dimension_semantics = [], scalar_prefetch = 0 : i64, scratch_operands = 0 : i64, tpu.core_type = #tpu.core_type<tc>} {
    %c0 = arith.constant 0 : index
    %c0_0 = arith.constant 0 : index
    %0 = vector.load %arg0[%c0, %c0_0] : memref<36x512xf32, #tpu.memory_space<vmem>>, vector<36x512xf32>
    %c0_1 = arith.constant 0 : index
    %c0_2 = arith.constant 0 : index
    %1 = vector.load %arg1[%c0_1, %c0_2] : memref<36x512xf32, #tpu.memory_space<vmem>>, vector<36x512xf32>
    %2 = arith.mulf %0, %1 : vector<36x512xf32>
    %cst = arith.constant dense<0.000000e+00> : vector<512xf32>
    %3 = vector.multi_reduction <add>, %2, %cst [0] : vector<36x512xf32> to vector<512xf32>
    %4 = vector.shape_cast %3 : vector<512xf32> to vector<1x512xf32>
    %c0_3 = arith.constant 0 : index
    %c0_4 = arith.constant 0 : index
    %5 = vector.load %arg2[%c0_3, %c0_4] : memref<1x512xf32, #tpu.memory_space<vmem>>, vector<1x512xf32>
    %6 = arith.addf %4, %5 : vector<1x512xf32>
    %c0_5 = arith.constant 0 : index
    %c0_6 = arith.constant 0 : index
    %7 = vector.load %arg3[%c0_5, %c0_6] : memref<1x512xf32, #tpu.memory_space<vmem>>, vector<1x512xf32>
    tpu.vector_store %arg3[%c0_5, %c0_6], %6 {strides = array<i32>} : memref<1x512xf32, #tpu.memory_space<vmem>>, vector<1x512xf32>,
    return
  }
}

</mosaic_0001>

<llo_original>
// kernel: tpu_custom_call.1
$region0: #{tpu_custom_call.1}
  #allocation0 [shape = 'u32[]', space=smem, size = 0x4, offset = 0x4, fixed_abs, tag = 'smem constant byte address 0x4 - core index']
  #allocation1 [shape = 'u32[72,128]{1,0:T(1,128)}', space=vmem, size = 0x9000, scoped, tag = 'internal scratch']
  %s0 = inlined_call_operand.hbm [shape: f32[36,512], index: 0, kind: input, shape index: {}]
  %s1 = inlined_call_operand.hbm [shape: f32[36,512], index: 1, kind: input, shape index: {}]
  %s2 = inlined_call_operand.hbm [shape: f32[1,512], index: 2, kind: input, shape index: {}]
  %s3 = inlined_call_operand.hbm [shape: f32[1,512], index: 3, kind: output, shape index: {}]
  %s4 = sld [smem:[#allocation0]]
  $region34: #{tpu_custom_call.1} parent=0
    _
  %s6 = ssub.s32 1, %s4
  %s7 = scalar_select 0, %s6, %s4
  $region1: #{tpu_custom_call.1} parent=0
    #allocation2 [shape = 'u8[81920]{0}', space=vmem, size = 0x14000, scoped, tag = 'input window, operand 0, single buffered']
    #allocation3 [shape = 's32[1]{0}', space=sflag, size = 0x4, scoped, tag = 'scoped memory for tpu_custom_call.1']
    #allocation4 [shape = 's32[1]{0}', space=sflag, size = 0x4, scoped, tag = 'scoped memory for tpu_custom_call.1']
    #allocation5 [shape = 'u8[81920]{0}', space=vmem, size = 0x14000, scoped, tag = 'input window, operand 1, single buffered']
    #allocation6 [shape = 's32[1]{0}', space=sflag, size = 0x4, scoped, tag = 'scoped memory for tpu_custom_call.1']
    #allocation7 [shape = 'u8[2048]{0}', space=vmem, size = 0x800, scoped, tag = 'input window, operand 2, single buffered']
    #allocation8 [shape = 'u8[2048]{0}', space=vmem, size = 0x800, scoped, tag = 'output window, operand 0, single buffered']
    %8 = vsyncpa [#allocation3], 0
    %9 = vsyncpa [#allocation6], 0
    %10 = vsyncpa [#allocation4], 0
    // Predicated region
    $region2: #{tpu_custom_call.1} parent=1 // pred_check
      _
    $region3: #{tpu_custom_call.1} parent=1 // pred_check_branch
      %12 = sbr.rel (0) target = $region5
    $region4: #{tpu_custom_call.1} parent=1 // pred_region
      %14 = vsyncadd [#allocation3], 0
      %s15 = sshll.u32 %s0, 4
      %s16 = int_to_ptr.hbm [resolvable:$true] %s15
      %s17 = sshll.u32 [#allocation2], 4
      %s18 = int_to_ptr.vmem [resolvable:$true] %s17
      %23 = dma.hbm_to_vmem [thread:$0]  %s16, 2560, %s18, [#allocation3], 512, 512, 32
    $region5: #{tpu_custom_call.1} parent=1 // pred_fallthru
      _
    // Predicated region
    $region6: #{tpu_custom_call.1} parent=1 // pred_check
      _
    $region7: #{tpu_custom_call.1} parent=1 // pred_check_branch
      %25 = sbr.rel (0) target = $region9
    $region8: #{tpu_custom_call.1} parent=1 // pred_region
      %27 = vsyncadd [#allocation6], 0
      %s28 = sshll.u32 %s1, 4
      %s29 = int_to_ptr.hbm [resolvable:$true] %s28
      %s30 = sshll.u32 [#allocation5], 4
      %s31 = int_to_ptr.vmem [resolvable:$true] %s30
      %36 = dma.hbm_to_vmem [thread:$0]  %s29, 2560, %s31, [#allocation6], 512, 512, 32
    $region9: #{tpu_custom_call.1} parent=1 // pred_fallthru
      _
    // Predicated region
    $region10: #{tpu_custom_call.1} parent=1 // pred_check
      _
    $region11: #{tpu_custom_call.1} parent=1 // pred_check_branch
      %38 = sbr.rel (0) target = $region13
    $region12: #{tpu_custom_call.1} parent=1 // pred_region
      %40 = vsyncadd [#allocation6], 0
      %s42 = sshll.u32 %s2, 4
      %s43 = int_to_ptr.hbm [resolvable:$true] %s42
      %s44 = sshll.u32 [#allocation7], 4
      %s45 = int_to_ptr.vmem [resolvable:$true] %s44
      %47 = dma.hbm_to_vmem [thread:$0]  %s43, 64, %s45, [#allocation6]
    $region13: #{tpu_custom_call.1} parent=1 // pred_fallthru
      _
    // Predicated region
    $region14: #{tpu_custom_call.1} parent=1 // pred_check
      _
    $region15: #{tpu_custom_call.1} parent=1 // pred_check_branch
      %49 = sbr.rel (0) target = $region17
    $region16: #{tpu_custom_call.1} parent=1 // pred_region
      %51 = dma.done [#allocation3], 2560
    $region17: #{tpu_custom_call.1} parent=1 // pred_fallthru
      _
    // Predicated region
    $region18: #{tpu_custom_call.1} parent=1 // pred_check
      _
    $region19: #{tpu_custom_call.1} parent=1 // pred_check_branch
      %53 = sbr.rel (0) target = $region21
    $region20: #{tpu_custom_call.1} parent=1 // pred_region
      %55 = dma.done [#allocation6], 2560
    $region21: #{tpu_custom_call.1} parent=1 // pred_fallthru
      _
    // Predicated region
    $region22: #{tpu_custom_call.1} parent=1 // pred_check
      _
    $region23: #{tpu_custom_call.1} parent=1 // pred_check_branch
      %57 = sbr.rel (0) target = $region25
    $region24: #{tpu_custom_call.1} parent=1 // pred_region
      %59 = dma.done [#allocation6], 64
    $region25: #{tpu_custom_call.1} parent=1 // pred_fallthru
      _
    %v60 = vld [vmem:[#allocation2] sm:$0xff]
    %v61 = vld [vmem:[#allocation2 + $0x8] sm:$0xff]
    %v62 = vld [vmem:[#allocation2 + $0x10] sm:$0xff]
    %v63 = vld [vmem:[#allocation2 + $0x18] sm:$0xff]
    %v64 = vld [vmem:[#allocation2 + $0x20] sm:$0xff]
    %v65 = vld [vmem:[#allocation2 + $0x28] sm:$0xff]
    %v66 = vld [vmem:[#allocation2 + $0x30] sm:$0xff]
    %v67 = vld [vmem:[#allocation2 + $0x38] sm:$0xff]
    %v68 = vld [vmem:[#allocation2 + $0x40] sm:$0xff]
    %v69 = vld [vmem:[#allocation2 + $0x48] sm:$0xff]
    %v70 = vld [vmem:[#allocation2 + $0x50] sm:$0xff]
    %v71 = vld [vmem:[#allocation2 + $0x58] sm:$0xff]
    %v72 = vld [vmem:[#allocation2 + $0x60] sm:$0xff]
    %v73 = vld [vmem:[#allocation2 + $0x68] sm:$0xff]
    %v74 = vld [vmem:[#allocation2 + $0x70] sm:$0xff]
    %v75 = vld [vmem:[#allocation2 + $0x78] sm:$0xff]
    %v76 = vld [vmem:[#allocation2 + $0x80] sm:$0xf]
    %v77 = vld [vmem:[#allocation2 + $0x88] sm:$0xf]
    %v78 = vld [vmem:[#allocation2 + $0x90] sm:$0xf]
    %v79 = vld [vmem:[#allocation2 + $0x98] sm:$0xf]
    %v80 = vld [vmem:[#allocation5] sm:$0xff]
    %v81 = vld [vmem:[#allocation5 + $0x8] sm:$0xff]
    %v82 = vld [vmem:[#allocation5 + $0x10] sm:$0xff]
    %v83 = vld [vmem:[#allocation5 + $0x18] sm:$0xff]
    %v84 = vld [vmem:[#allocation5 + $0x20] sm:$0xff]
    %v85 = vld [vmem:[#allocation5 + $0x28] sm:$0xff]
    %v86 = vld [vmem:[#allocation5 + $0x30] sm:$0xff]
    %v87 = vld [vmem:[#allocation5 + $0x38] sm:$0xff]
    %v88 = vld [vmem:[#allocation5 + $0x40] sm:$0xff]
    %v89 = vld [vmem:[#allocation5 + $0x48] sm:$0xff]
    %v90 = vld [vmem:[#allocation5 + $0x50] sm:$0xff]
    %v91 = vld [vmem:[#allocation5 + $0x58] sm:$0xff]
    %v92 = vld [vmem:[#allocation5 + $0x60] sm:$0xff]
    %v93 = vld [vmem:[#allocation5 + $0x68] sm:$0xff]
    %v94 = vld [vmem:[#allocation5 + $0x70] sm:$0xff]
    %v95 = vld [vmem:[#allocation5 + $0x78] sm:$0xff]
    %v96 = vld [vmem:[#allocation5 + $0x80] sm:$0xf]
    %v97 = vld [vmem:[#allocation5 + $0x88] sm:$0xf]
    %v98 = vld [vmem:[#allocation5 + $0x90] sm:$0xf]
    %v99 = vld [vmem:[#allocation5 + $0x98] sm:$0xf]
    %v100 = vmul.f32 %v60, %v80
    %v101 = vmul.f32 %v61, %v81
    %v102 = vmul.f32 %v62, %v82
    %v103 = vmul.f32 %v63, %v83
    %v104 = vmul.f32 %v64, %v84
    %v105 = vmul.f32 %v65, %v85
    %v106 = vmul.f32 %v66, %v86
    %v107 = vmul.f32 %v67, %v87
    %v108 = vmul.f32 %v68, %v88
    %v109 = vmul.f32 %v69, %v89
    %v110 = vmul.f32 %v70, %v90
    %v111 = vmul.f32 %v71, %v91
    %v112 = vmul.f32 %v72, %v92
    %v113 = vmul.f32 %v73, %v93
    %v114 = vmul.f32 %v74, %v94
    %v115 = vmul.f32 %v75, %v95
    %v116 = vmul.f32 %v76, %v96
    %v117 = vmul.f32 %v77, %v97
    %v118 = vmul.f32 %v78, %v98
    %v119 = vmul.f32 %v79, %v99
    %v120 = vadd.f32 %v100, %v104
    %v121 = vadd.f32 %v120, %v108
    %v122 = vadd.f32 %v121, %v112
    %vm123 = vcmask 1043456
    %v124 = vsel %vm123, %v116, 0.0
    %v125 = vadd.f32 %v122, %v124
    %v126 = vrot.slane %v125, 4
    %v127 = vadd.f32 %v125, %v126
    %v128 = vrot.slane %v127, 2
    %v129 = vadd.f32 %v127, %v128
    %v130 = vrot.slane %v129, 1
    %v131 = vadd.f32 %v129, %v130
    %v132 = vadd.f32 %v101, %v105
    %v133 = vadd.f32 %v132, %v109
    %v134 = vadd.f32 %v133, %v113
    %v135 = vsel %vm123, %v117, 0.0
    %v136 = vadd.f32 %v134, %v135
    %v137 = vrot.slane %v136, 4
    %v138 = vadd.f32 %v136, %v137
    %v139 = vrot.slane %v138, 2
    %v140 = vadd.f32 %v138, %v139
    %v141 = vrot.slane %v140, 1
    %v142 = vadd.f32 %v140, %v141
    %v143 = vadd.f32 %v102, %v106
    %v144 = vadd.f32 %v143, %v110
    %v145 = vadd.f32 %v144, %v114
    %v146 = vsel %vm123, %v118, 0.0
    %v147 = vadd.f32 %v145, %v146
    %v148 = vrot.slane %v147, 4
    %v149 = vadd.f32 %v147, %v148
    %v150 = vrot.slane %v149, 2
    %v151 = vadd.f32 %v149, %v150
    %v152 = vrot.slane %v151, 1
    %v153 = vadd.f32 %v151, %v152
    %v154 = vadd.f32 %v103, %v107
    %v155 = vadd.f32 %v154, %v111
    %v156 = vadd.f32 %v155, %v115
    %v157 = vsel %vm123, %v119, 0.0
    %v158 = vadd.f32 %v156, %v157
    %v159 = vrot.slane %v158, 4
    %v160 = vadd.f32 %v158, %v159
    %v161 = vrot.slane %v160, 2
    %v162 = vadd.f32 %v160, %v161
    %v163 = vrot.slane %v162, 1
    %v164 = vadd.f32 %v162, %v163
    %v165 = vld [vmem:[#allocation7] sm:$0xf]
    %v167 = vperm.slane %v165, 0
    %v168 = vperm.slane %v165, 1
    %v169 = vperm.slane %v165, 2
    %v170 = vperm.slane %v165, 3
    %v175 = vadd.f32 %v131, %v167
    %v176 = vadd.f32 %v142, %v168
    %v177 = vadd.f32 %v153, %v169
    %v178 = vadd.f32 %v164, %v170
    %v183 = vrot.slane %v176, 7
    %v184 = vrot.slane %v177, 6
    %v185 = vrot.slane %v178, 5
    %vm186 = vcmask 1040384
    %v187 = vsel %vm186, %v175, %v183
    %vm188 = vcmask 1042434
    %v189 = vsel %vm188, %v184, %v185
    %vm190 = vcmask 1041408
    %v191 = vsel %vm190, %v187, %v189
    %v193 = vlaneseq
    %vm194 = vcmp.ge.s32.totalorder %v193, 0
    %vm195 = vcmp.lt.s32.totalorder %v193, 512
    %vm196 = vmand %vm194, %vm195
    %197 = vst.msk [vmem:[#allocation8] sm:$0xf] %vm196, %v191
    // Predicated region
    $region26: #{tpu_custom_call.1} parent=1 // pred_check
      _
    $region27: #{tpu_custom_call.1} parent=1 // pred_check_branch
      %199 = sbr.rel (0) target = $region29
    $region28: #{tpu_custom_call.1} parent=1 // pred_region
      %201 = vsyncadd [#allocation4], 0
      %s203 = sshll.u32 [#allocation8], 4
      %s204 = int_to_ptr.vmem [resolvable:$true] %s203
      %s205 = sshll.u32 %s3, 4
      %s206 = int_to_ptr.hbm [resolvable:$true] %s205
      %208 = dma.vmem_to_hbm [thread:$0]  %s204, 64, %s206, [#allocation4]
    $region29: #{tpu_custom_call.1} parent=1 // pred_fallthru
      _
    // Predicated region
    $region30: #{tpu_custom_call.1} parent=1 // pred_check
      _
    $region31: #{tpu_custom_call.1} parent=1 // pred_check_branch
      %210 = sbr.rel (0) target = $region33
    $region32: #{tpu_custom_call.1} parent=1 // pred_region
      %212 = dma.done [#allocation4], 64
    $region33: #{tpu_custom_call.1} parent=1 // pred_fallthru
      _
    %213 = vsyncpa [#allocation3], 1
    %214 = vsyncpa [#allocation6], 1
    %215 = vsyncpa [#allocation4], 1

</llo_original>
